<compile_context>
chip_gen: v6e
topology: v6e:2x2x1
jax: 0.10.0
libtpu: 0.0.40
codegen_flags: <defaults>
</compile_context>

<pallas_src>
import functools

import jax
import jax.numpy as jnp
from jax.experimental import pallas as pl
from jax.experimental.pallas import tpu as pltpu

EPS = 1e-6
LANE = 128
SUBLANE = 8

_PER_TILE_BUDGET = 2 * 1024 * 1024   # bytes per (tb, td) input tile (lane-padded)
_MAX_TB = 1024                       # diminishing returns past ~512-1024 rows


def _round_up(x, m):
    return -(-x // m) * m


def _largest_aligned_divisor(n, max_val, align):
    """Largest t <= max_val with t % align == 0 and n % t == 0 (or None)."""
    t = (min(n, max_val) // align) * align
    while t >= align:
        if n % t == 0:
            return t
        t -= align
    return None


def _choose_tiling(batch, feat, itemsize):
    """Pick (num_shards, tb, td) from shape, dtype and the VMEM tile budget."""
    lane_feat = _round_up(feat, LANE)            # blocks are lane-padded in VMEM
    row_bytes = lane_feat * itemsize
    tb_fit = (_PER_TILE_BUDGET // row_bytes) // SUBLANE * SUBLANE

    if feat % LANE != 0 or tb_fit >= 64:
        # Keep the whole feature axis in one tile (single reduction step).
        td = feat
        tb = tb_fit
        if tb < SUBLANE:
            # Very wide, non-lane-aligned feature axis: allow a taller budget.
            tb = ((8 * _PER_TILE_BUDGET) // row_bytes) // SUBLANE * SUBLANE
            if tb < SUBLANE:
                raise ValueError(
                    f"feature dim {feat} is too wide to keep untiled and is "
                    f"not a multiple of {LANE}; pad it to a multiple of 128.")
    else:
        # Lane-aligned feature tiling so the batch tile stays tall.
        max_td = max(LANE, (_PER_TILE_BUDGET // (256 * itemsize)) // LANE * LANE)
        td = _largest_aligned_divisor(feat, max_td, LANE) or LANE
        tb = (_PER_TILE_BUDGET // (td * itemsize)) // SUBLANE * SUBLANE

    tb = max(SUBLANE, min(tb, _MAX_TB, _round_up(batch, SUBLANE)))
    total_tiles = pl.cdiv(batch, tb)
    # Two shards feed both TensorCores on megacore parts; on single-TC chips
    # the extra axis is a near-free sequential split.  Only accept an odd tile
    # count (one wasted phantom-tile DMA) when the grid is large.
    num_shards = 2 if (total_tiles >= 2 and
                       (total_tiles % 2 == 0 or total_tiles >= 8)) else 1
    return num_shards, tb, td


def _make_kernel(*, tb, td, feat_steps, batch_steps, batch):
    """Build the kernel body for a fixed (static) tiling configuration."""
    n_full, rem = divmod(td, LANE)

    def kernel(yhat_ref, y_ref, part_ref, sqrt_acc_ref, se_acc_ref=None):
        c = pl.program_id(0)   # shard
        i = pl.program_id(1)   # batch tile within this shard
        k = pl.program_id(2)   # feature tile
        nb = pl.num_programs(1)
        nk = pl.num_programs(2)

        # Per-shard init of the per-sample sqrt accumulator.
        @pl.when((i == 0) & (k == 0))
        def _():
            sqrt_acc_ref[...] = jnp.zeros_like(sqrt_acc_ref)

        # Lane-folded squared error for this tile: VALU-only adds; the
        # cross-lane reduce is deferred to once per batch tile.
        folded = None
        for ci in range(n_full):
            sl = slice(ci * LANE, (ci + 1) * LANE)
            d = (yhat_ref[:, sl].astype(jnp.float32)
                 - y_ref[:, sl].astype(jnp.float32))
            sq = d * d
            folded = sq if folded is None else folded + sq

        rem_sum = None
        if rem:  # only possible when the feature axis is untiled (nk == 1)
            sl = slice(n_full * LANE, td)
            d = (yhat_ref[:, sl].astype(jnp.float32)
                 - y_ref[:, sl].astype(jnp.float32))
            rem_sum = jnp.sum(d * d, axis=1, keepdims=True)

        def accumulate_tile(per_sample):
            # per_sample: (tb, 1) f32 row sums of squared error for this tile.
            # Mask rows past the true batch size (ragged last tile, phantom
            # tiles from an odd tile count on the 2-shard grid, blocks taller
            # than the array): they contribute exactly 0.
            tile_idx = c * batch_steps + i            # unclamped global tile
            row = tile_idx * tb + jax.lax.broadcasted_iota(
                jnp.int32, (tb, 1), 0)
            contrib = jnp.where(row < batch,
                                jnp.sqrt(per_sample + jnp.float32(EPS)),
                                jnp.float32(0.0))
            sqrt_acc_ref[...] += contrib

        if feat_steps == 1:
            # Single feature step: keep the fold in registers, no se_acc.
            per_sample = (jnp.sum(folded, axis=1, keepdims=True)
                          if folded is not None
                          else jnp.zeros((tb, 1), jnp.float32))
            if rem_sum is not None:
                per_sample = per_sample + rem_sum
            accumulate_tile(per_sample)
        else:
            # Tiled feature axis (td % 128 == 0): accumulate the lane-folded
            # partials; the XLU lane reduce runs once per batch tile.
            @pl.when(k == 0)
            def _():
                se_acc_ref[...] = jnp.zeros_like(se_acc_ref)

            se_acc_ref[...] += folded

            @pl.when(k == nk - 1)
            def _():
                accumulate_tile(jnp.sum(se_acc_ref[...], axis=1,
                                        keepdims=True))

        # Shard finalize: single cross-sublane reduce, write the shard partial.
        @pl.when((i == nb - 1) & (k == nk - 1))
        def _():
            part_ref[...] = jnp.sum(sqrt_acc_ref[...]).reshape(1, 1, 1)

    return kernel


@functools.partial(jax.jit, static_argnames=("num_shards", "tb", "td"))
def _overall_error_jit(yhat, y, *, num_shards, tb, td):
    """mean_i sqrt(sum_j (yhat-y)^2 + eps), fully fused around one pallas_call."""
    batch, feat = yhat.shape
    feat_steps = feat // td
    total_tiles = pl.cdiv(batch, tb)
    batch_steps = pl.cdiv(total_tiles, num_shards)
    last_tile = total_tiles - 1

    def in_map(c, i, k):
        # Clamp: with an odd tile count and 2 shards the final grid step is a
        # phantom tile; its rows are masked out inside the kernel.
        return (jnp.minimum(c * batch_steps + i, last_tile), k)

    kernel = _make_kernel(tb=tb, td=td, feat_steps=feat_steps,
                          batch_steps=batch_steps, batch=batch)

    scratch = [pltpu.VMEM((tb, 1), jnp.float32)]            # per-sample sqrt acc
    if feat_steps > 1:
        scratch.append(pltpu.VMEM((tb, LANE), jnp.float32))  # lane-folded sq-err

    itemsize = jnp.dtype(yhat.dtype).itemsize
    lane_td = _round_up(td, LANE)
    # 2 inputs x 2 pipeline buffers of the lane-padded tile + scratch/headroom.
    vmem_limit = 4 * tb * lane_td * itemsize + 2 * tb * LANE * 4 + (8 << 20)

    partials = pl.pallas_call(
        kernel,
        out_shape=jax.ShapeDtypeStruct((num_shards, 1, 1), jnp.float32),
        grid_spec=pltpu.PrefetchScalarGridSpec(
            num_scalar_prefetch=0,
            grid=(num_shards, batch_steps, feat_steps),
            in_specs=[pl.BlockSpec((tb, td), in_map),
                      pl.BlockSpec((tb, td), in_map)],
            out_specs=pl.BlockSpec((1, 1, 1), lambda c, i, k: (c, 0, 0)),
            scratch_shapes=scratch,
        ),
        compiler_params=pltpu.CompilerParams(
            dimension_semantics=("parallel", "arbitrary", "arbitrary"),
            vmem_limit_bytes=int(vmem_limit),
        ),
    )(yhat, y)
    # Mean over the true (unpadded) batch size; fused into this jit so there
    # are no eager HBM passes around the kernel.
    return jnp.sum(partials) * jnp.float32(1.0 / batch)


def overall_error(yhat: jax.Array, y: jax.Array, *,
                  num_shards: int | None = None,
                  tb: int | None = None,
                  td: int | None = None) -> jax.Array:
    assert yhat.shape == y.shape and yhat.ndim == 2
    if y.dtype != yhat.dtype:
        y = y.astype(yhat.dtype)
    batch, feat = yhat.shape

    itemsize = jnp.dtype(yhat.dtype).itemsize
    a_shards, a_tb, a_td = _choose_tiling(batch, feat, itemsize)
    num_shards = a_shards if num_shards is None else num_shards
    tb = a_tb if tb is None else tb
    td = a_td if td is None else td

    assert tb > 0 and tb % SUBLANE == 0, "tb must be a positive multiple of 8"
    assert feat % td == 0, "td must evenly divide the feature dim"
    assert td == feat or td % LANE == 0, (
        "a tiled feature axis must use lane-aligned (multiple-of-128) tiles")
    return _overall_error_jit(yhat, y, num_shards=num_shards, tb=tb, td=td)


def overall_error_ref(yhat, y, eps=EPS):
    yhat = yhat.astype(jnp.float32)
    y = y.astype(jnp.float32)
    se = (yhat - y) ** 2
    return jnp.sqrt(se.sum(axis=1) + eps).mean()


if __name__ == "__main__":
    key = jax.random.PRNGKey(0)
    keys = jax.random.split(key, 10)

    # 1) Small shape consistent with the module's typical use (B=8, D=32).
    B, D = 8, 32
    yhat = jax.random.normal(keys[0], (B, D), dtype=jnp.float32)
    y = jax.random.normal(keys[1], (B, D), dtype=jnp.float32)
    out = overall_error(yhat, y)
    jax.block_until_ready(out)
    ref = overall_error_ref(yhat, y)
    assert jnp.allclose(out, ref, rtol=1e-5, atol=1e-6), (out, ref)

    # 2) Larger square case (single tile, single shard).
    B2, D2 = 256, 256
    yhat2 = jax.random.normal(keys[2], (B2, D2), dtype=jnp.float32)
    y2 = jax.random.normal(keys[3], (B2, D2), dtype=jnp.float32)
    ref2 = overall_error_ref(yhat2, y2)
    out2 = overall_error(yhat2, y2)
    jax.block_until_ready(out2)
    assert jnp.allclose(out2, ref2, rtol=1e-5, atol=1e-5), (out2, ref2)

    # 3) Explicit tiling override: 2 shards + multi-step batch AND feature axes
    #    (exercises every pl.when phase of the accumulation pipeline).
    out3 = overall_error(yhat2, y2, num_shards=2, tb=64, td=128)
    jax.block_until_ready(out3)
    assert jnp.allclose(out3, ref2, rtol=1e-5, atol=1e-5), (out3, ref2)

    # 4) Ragged batch (not a multiple of 8) and non-lane-aligned feature dim:
    #    in-kernel row mask + remainder lane chunk, no wrapper padding copies.
    B4, D4 = 93, 200
    yhat4 = jax.random.normal(keys[4], (B4, D4), dtype=jnp.float32)
    y4 = jax.random.normal(keys[5], (B4, D4), dtype=jnp.float32)
    out4 = overall_error(yhat4, y4)
    jax.block_until_ready(out4)
    ref4 = overall_error_ref(yhat4, y4)
    assert jnp.allclose(out4, ref4, rtol=1e-5, atol=1e-5), (out4, ref4)

    # 5) bf16 inputs streamed natively (half the HBM traffic), forced 2 shards
    #    with an odd tile count (phantom-tile clamp) and a ragged last tile.
    B5, D5 = 2500, 512
    yhat5 = jax.random.normal(keys[6], (B5, D5), dtype=jnp.bfloat16)
    y5 = jax.random.normal(keys[7], (B5, D5), dtype=jnp.bfloat16)
    out5 = overall_error(yhat5, y5, num_shards=2)
    jax.block_until_ready(out5)
    ref5 = overall_error_ref(yhat5, y5)
    assert jnp.allclose(out5, ref5, rtol=1e-4, atol=1e-5), (out5, ref5)

    # 6) Ragged batch with an explicitly tiled feature axis (row mask + se_acc).
    B6, D6 = 100, 256
    yhat6 = jax.random.normal(keys[8], (B6, D6), dtype=jnp.float32)
    y6 = jax.random.normal(keys[9], (B6, D6), dtype=jnp.float32)
    out6 = overall_error(yhat6, y6, num_shards=2, tb=32, td=128)
    jax.block_until_ready(out6)
    ref6 = overall_error_ref(yhat6, y6)
    assert jnp.allclose(out6, ref6, rtol=1e-5, atol=1e-5), (out6, ref6)

    print("KERNEL_OK")
</pallas_src>

<mosaic_0001>
module attributes {stable_mosaic.version = 11 : i64} {
  func.func @kernel(%arg0: i32, %arg1: i32, %arg2: i32, %arg3: memref<8x32xf32, #tpu.memory_space<vmem>>, %arg4: memref<8x32xf32, #tpu.memory_space<vmem>>, %arg5: memref<1x1x1xf32, #tpu.memory_space<vmem>>, %arg6: memref<8x1xf32, #tpu.memory_space<vmem>>) attributes {dimension_semantics = [#tpu.dimension_semantics<parallel>, #tpu.dimension_semantics<arbitrary>, #tpu.dimension_semantics<arbitrary>], iteration_bounds = array<i64: 1, 1, 1>, scalar_prefetch = 0 : i64, scratch_operands = 1 : i64, tpu.core_type = #tpu.core_type<tc>, window_params = [{transform_indices = @transform_0, window_bounds = array<i64: 8, 32>}, {transform_indices = @transform_1, window_bounds = array<i64: 8, 32>}, {transform_indices = @transform_2, window_bounds = array<i64: 1, 1, 1>}]} {
    %c0_i32 = arith.constant 0 : i32
    %0 = arith.cmpi eq, %arg1, %c0_i32 : i32
    %c0_i32_0 = arith.constant 0 : i32
    %1 = arith.cmpi eq, %arg2, %c0_i32_0 : i32
    %2 = arith.andi %0, %1 : i1
    %3 = arith.extui %2 : i1 to i32
    %c0_i32_1 = arith.constant 0 : i32
    %4 = arith.cmpi ne, %3, %c0_i32_1 : i32
    scf.if %4 {
      %cst_16 = arith.constant 0.000000e+00 : f32
      %34 = vector.broadcast %cst_16 : f32 to vector<8x1xf32>
      %c0_17 = arith.constant 0 : index
      %c0_18 = arith.constant 0 : index
      %35 = vector.load %arg6[%c0_17, %c0_18] : memref<8x1xf32, #tpu.memory_space<vmem>>, vector<8x1xf32>
      tpu.vector_store %arg6[%c0_17, %c0_18], %34 {strides = array<i32>} : memref<8x1xf32, #tpu.memory_space<vmem>>, vector<8x1xf32>,
    } else {
    }
    %c0 = arith.constant 0 : index
    %c0_2 = arith.constant 0 : index
    %5 = vector.load %arg3[%c0, %c0_2] : memref<8x32xf32, #tpu.memory_space<vmem>>, vector<8x32xf32>
    %c0_3 = arith.constant 0 : index
    %c0_4 = arith.constant 0 : index
    %6 = vector.load %arg4[%c0_3, %c0_4] : memref<8x32xf32, #tpu.memory_space<vmem>>, vector<8x32xf32>
    %7 = arith.subf %5, %6 : vector<8x32xf32>
    %8 = arith.mulf %7, %7 : vector<8x32xf32>
    %cst = arith.constant dense<0.000000e+00> : vector<8xf32>
    %9 = vector.multi_reduction <add>, %8, %cst [1] : vector<8x32xf32> to vector<8xf32>
    %10 = vector.shape_cast %9 : vector<8xf32> to vector<8x1xf32>
    %cst_5 = arith.constant 0.000000e+00 : f32
    %11 = vector.broadcast %cst_5 : f32 to vector<8x1xf32>
    %12 = arith.addf %11, %10 : vector<8x1xf32>
    %c1_i32 = arith.constant 1 : i32
    %13 = arith.muli %arg0, %c1_i32 : i32
    %14 = arith.addi %13, %arg1 : i32
    %c8_i32 = arith.constant 8 : i32
    %15 = arith.muli %14, %c8_i32 : i32
    %16 = tpu.iota {dimensions = array<i32: 0>} : vector<8x1xi32>
    %17 = vector.broadcast %15 : i32 to vector<8x1xi32>
    %18 = arith.addi %17, %16 : vector<8x1xi32>
    %c8_i32_6 = arith.constant 8 : i32
    %19 = vector.broadcast %c8_i32_6 : i32 to vector<8x1xi32>
    %20 = arith.cmpi slt, %18, %19 : vector<8x1xi32>
    %cst_7 = arith.constant 9.99999997E-7 : f32
    %21 = vector.broadcast %cst_7 : f32 to vector<8x1xf32>
    %22 = arith.addf %12, %21 : vector<8x1xf32>
    %23 = math.sqrt %22 : vector<8x1xf32>
    %cst_8 = arith.constant 0.000000e+00 : f32
    %24 = vector.broadcast %cst_8 : f32 to vector<8x1xf32>
    %25 = arith.select %20, %23, %24 : vector<8x1xi1>, vector<8x1xf32>
    %c0_9 = arith.constant 0 : index
    %c0_10 = arith.constant 0 : index
    %26 = vector.load %arg6[%c0_9, %c0_10] : memref<8x1xf32, #tpu.memory_space<vmem>>, vector<8x1xf32>
    %27 = arith.addf %26, %25 : vector<8x1xf32>
    %c0_11 = arith.constant 0 : index
    %c0_12 = arith.constant 0 : index
    %28 = vector.load %arg6[%c0_11, %c0_12] : memref<8x1xf32, #tpu.memory_space<vmem>>, vector<8x1xf32>
    tpu.vector_store %arg6[%c0_11, %c0_12], %27 {strides = array<i32>} : memref<8x1xf32, #tpu.memory_space<vmem>>, vector<8x1xf32>,
    %c0_i32_13 = arith.constant 0 : i32
    %29 = arith.cmpi eq, %arg1, %c0_i32_13 : i32
    %c0_i32_14 = arith.constant 0 : i32
    %30 = arith.cmpi eq, %arg2, %c0_i32_14 : i32
    %31 = arith.andi %29, %30 : i1
    %32 = arith.extui %31 : i1 to i32
    %c0_i32_15 = arith.constant 0 : i32
    %33 = arith.cmpi ne, %32, %c0_i32_15 : i32
    scf.if %33 {
      %c0_16 = arith.constant 0 : index
      %c0_17 = arith.constant 0 : index
      %34 = vector.load %arg6[%c0_16, %c0_17] : memref<8x1xf32, #tpu.memory_space<vmem>>, vector<8x1xf32>
      %35 = vector.shape_cast %34 : vector<8x1xf32> to vector<1x8x1xf32>
      %cst_18 = arith.constant dense<0.000000e+00> : vector<1xf32>
      %36 = vector.multi_reduction <add>, %35, %cst_18 [1, 2] : vector<1x8x1xf32> to vector<1xf32>
      %37 = vector.shape_cast %36 : vector<1xf32> to vector<1x1x1xf32>
      %38 = vector.extract %37[0, 0, 0] : f32 from vector<1x1x1xf32>
      %39 = vector.broadcast %38 : f32 to vector<1x1x1xf32>
      %c0_19 = arith.constant 0 : index
      %c0_20 = arith.constant 0 : index
      %c0_21 = arith.constant 0 : index
      %40 = vector.load %arg5[%c0_19, %c0_20, %c0_21] : memref<1x1x1xf32, #tpu.memory_space<vmem>>, vector<1x1x1xf32>
      tpu.vector_store %arg5[%c0_19, %c0_20, %c0_21], %39 {strides = array<i32>} : memref<1x1x1xf32, #tpu.memory_space<vmem>>, vector<1x1x1xf32>,
    } else {
    }
    return
  }
  func.func @transform_0(%arg0: i32, %arg1: i32, %arg2: i32) -> (i32, i32) {
    %c1_i32 = arith.constant 1 : i32
    %0 = arith.muli %arg0, %c1_i32 : i32
    %1 = arith.addi %0, %arg1 : i32
    %c0_i32 = arith.constant 0 : i32
    %2 = arith.minsi %1, %c0_i32 : i32
    %c0_i32_0 = arith.constant 0 : i32
    return %2, %arg2 : i32, i32
  }
  func.func @transform_1(%arg0: i32, %arg1: i32, %arg2: i32) -> (i32, i32) {
    %c1_i32 = arith.constant 1 : i32
    %0 = arith.muli %arg0, %c1_i32 : i32
    %1 = arith.addi %0, %arg1 : i32
    %c0_i32 = arith.constant 0 : i32
    %2 = arith.minsi %1, %c0_i32 : i32
    %c0_i32_0 = arith.constant 0 : i32
    return %2, %arg2 : i32, i32
  }
  func.func @transform_2(%arg0: i32, %arg1: i32, %arg2: i32) -> (i32, i32, i32) {
    %c0_i32 = arith.constant 0 : i32
    %c0_i32_0 = arith.constant 0 : i32
    %c0_i32_1 = arith.constant 0 : i32
    return %arg0, %c0_i32, %c0_i32_0 : i32, i32, i32
  }
}

</mosaic_0001>

<llo_original>
// kernel: _overall_error_jit.1
$region0: #{_overall_error_jit.1}
  #allocation0 [shape = 'u32[]', space=smem, size = 0x4, offset = 0x4, fixed_abs, tag = 'smem constant byte address 0x4 - core index']
  #allocation1 [shape = 'u32[144,128]{1,0:T(1,128)}', space=vmem, size = 0x12000, scoped, tag = 'internal scratch']
  #allocation2 [shape = 'f32[8,1]{1,0:T(8,128)}', space=vmem, size = 0x1000, scoped, tag = 'scratch operand']
  %s0 = inlined_call_operand.hbm [shape: f32[8,32], index: 0, kind: input, shape index: {}]
  %s1 = inlined_call_operand.hbm [shape: f32[8,32], index: 1, kind: input, shape index: {}]
  %s2 = inlined_call_operand.hbm [shape: f32[1,1,1], index: 2, kind: output, shape index: {}]
  %s3 = sld [smem:[#allocation0]]
  $region34: #{_overall_error_jit.1} parent=0
    _
  %s5 = ssub.s32 1, %s3
  %s6 = scalar_select 0, %s5, %s3
  $region1: #{_overall_error_jit.1} parent=0
    #allocation3 [shape = 'u8[4096]{0}', space=vmem, size = 0x1000, scoped, tag = 'input window, operand 0, single buffered']
    #allocation4 [shape = 's32[1]{0}', space=sflag, size = 0x4, scoped, tag = 'scoped memory for _overall_error_jit.1']
    #allocation5 [shape = 's32[1]{0}', space=sflag, size = 0x4, scoped, tag = 'scoped memory for _overall_error_jit.1']
    #allocation6 [shape = 'u8[4096]{0}', space=vmem, size = 0x1000, scoped, tag = 'input window, operand 1, single buffered']
    #allocation7 [shape = 's32[1]{0}', space=sflag, size = 0x4, scoped, tag = 'scoped memory for _overall_error_jit.1']
    #allocation8 [shape = 'u8[512]{0}', space=vmem, size = 0x400, scoped, tag = 'output window, operand 0, single buffered']
    %7 = vsyncpa [#allocation4], 0
    %8 = vsyncpa [#allocation7], 0
    %9 = vsyncpa [#allocation5], 0
    // Predicated region
    $region2: #{_overall_error_jit.1} parent=1 // pred_check
      _
    $region3: #{_overall_error_jit.1} parent=1 // pred_check_branch
      %11 = sbr.rel (0) target = $region5
    $region4: #{_overall_error_jit.1} parent=1 // pred_region
      %s12 = sadd.s32 0, 0
      %p13 = scmp.lt.s32.totalorder %s12, 0
      %s14 = scalar_select %p13, %s12, 0
      %s16 = ssub.s32 128, 128
      %17 = vsyncadd [#allocation4], %s16
      %s18 = smul.addr %s14, 128
      %s19 = scalar_lea.hbm %s0, %s18
      %s21 = sshll.u32 [#allocation3], 4
      %s22 = int_to_ptr.vmem [resolvable:$true] %s21
      %24 = dma.hbm_to_vmem [thread:$0]  %s19, 128, %s22, [#allocation4]
    $region5: #{_overall_error_jit.1} parent=1 // pred_fallthru
      _
    // Predicated region
    $region6: #{_overall_error_jit.1} parent=1 // pred_check
      _
    $region7: #{_overall_error_jit.1} parent=1 // pred_check_branch
      %26 = sbr.rel (0) target = $region9
    $region8: #{_overall_error_jit.1} parent=1 // pred_region
      %s27 = sadd.s32 0, 0
      %p28 = scmp.lt.s32.totalorder %s27, 0
      %s29 = scalar_select %p28, %s27, 0
      %s31 = ssub.s32 128, 128
      %32 = vsyncadd [#allocation7], %s31
      %s33 = smul.addr %s29, 128
      %s34 = scalar_lea.hbm %s1, %s33
      %s36 = sshll.u32 [#allocation6], 4
      %s37 = int_to_ptr.vmem [resolvable:$true] %s36
      %39 = dma.hbm_to_vmem [thread:$0]  %s34, 128, %s37, [#allocation7]
    $region9: #{_overall_error_jit.1} parent=1 // pred_fallthru
      _
    // Predicated region
    $region10: #{_overall_error_jit.1} parent=1 // pred_check
      _
    $region11: #{_overall_error_jit.1} parent=1 // pred_check_branch
      %41 = sbr.rel (0) target = $region13
    $region12: #{_overall_error_jit.1} parent=1 // pred_region
      %42 = dma.done [#allocation4], 128
    $region13: #{_overall_error_jit.1} parent=1 // pred_fallthru
      _
    // Predicated region
    $region14: #{_overall_error_jit.1} parent=1 // pred_check
      _
    $region15: #{_overall_error_jit.1} parent=1 // pred_check_branch
      %44 = sbr.rel (0) target = $region17
    $region16: #{_overall_error_jit.1} parent=1 // pred_region
      %45 = dma.done [#allocation7], 128
    $region17: #{_overall_error_jit.1} parent=1 // pred_fallthru
      _
    %s46 = sadd.s32 0, 0
    %p47 = scmp.lt.s32.totalorder %s46, 0
    %s48 = scalar_select %p47, %s46, 0
    %s49 = sadd.s32 0, 0
    %p50 = scmp.lt.s32.totalorder %s49, 0
    %s51 = scalar_select %p50, %s49, 0
    %p52 = scmp.eq.s32.totalorder 0, 0
    %p53 = scmp.eq.s32.totalorder 0, 0
    %p54 = pnand %p52, %p53
    %p55 = pneg %p54
    // Predicated region
    $region18: #{_overall_error_jit.1} parent=1 // pred_check
      _
    $region19: #{_overall_error_jit.1} parent=1 // pred_check_branch
      %57 = sbr.rel (%p54) target = $region21
    $region20: #{_overall_error_jit.1} parent=1 // pred_region
      %vm58 = vcmask 7168
      %59 = vst.msk [vmem:[#allocation2] sm:$0xff] %vm58, 0.0
    $region21: #{_overall_error_jit.1} parent=1 // pred_fallthru
      _
    %v60 = vld [vmem:[#allocation3] sm:$0xff]
    %v61 = vld [vmem:[#allocation6] sm:$0xff]
    %v62 = vsub.f32 %v60, %v61
    %v63 = vmul.f32 %v62, %v62
    %vm64 = vcmask 261120
    %v65 = vsel %vm64, %v63, 0.0
    %66 = vadd.xlane.f32.xlu0 %v65
    %v67 = vpop.xlane.xlu0 %66
    %v68 = vadd.f32 %v67, 0.0
    %s69 = sadd.s32 0, 0
    %s70 = smul.u32 %s69, 8
    %v71 = vlaneseq
    %v72 = vshrl.u32 %v71, 7
    %v73 = vstv %s70
    %v74 = vadd.s32 %v73, %v72
    %vm75 = vcmp.lt.s32.totalorder %v74, 8
    %v76 = vadd.f32 %v68, 1e-06
    %v77 = vrsqrt.pop %v76
    %v78 = vmul.f32 %v76, %v77
    %vm79 = vcmp.eq.f32.partialorder %v76, inf
    %v80 = vsel %vm79, %v76, %v78
    %vm81 = vcmp.eq.f32.partialorder %v76, 0.0
    %v82 = vand.u32 %v76, 2147483648
    %v83 = vsel %vm81, %v82, %v80
    %v84 = vsel %vm75, %v83, 0.0
    %v85 = vld [vmem:[#allocation2] sm:$0xff]
    %v86 = vadd.f32 %v85, %v84
    %vm87 = vcmask 7168
    %88 = vst.msk [vmem:[#allocation2] sm:$0xff] %vm87, %v86
    // Predicated region
    $region22: #{_overall_error_jit.1} parent=1 // pred_check
      _
    $region23: #{_overall_error_jit.1} parent=1 // pred_check_branch
      %90 = sbr.rel (%p54) target = $region25
    $region24: #{_overall_error_jit.1} parent=1 // pred_region
      %v91 = vld [vmem:[#allocation2] sm:$0xff]
      %v92 = vsel %vm87, %v91, 0.0
      %93 = vadd.xlane.f32.xlu0 %v92
      %v94 = vpop.xlane.xlu0 %93
      %v95 = vrot.slane %v94, 4
      %v96 = vadd.f32 %v94, %v95
      %v97 = vrot.slane %v96, 2
      %v98 = vadd.f32 %v96, %v97
      %v99 = vrot.slane %v98, 1
      %v100 = vadd.f32 %v98, %v99
      %s101 = vtos %v100
      %v102 = vstv %s101
      %vm103 = vcmask 0
      %104 = vst.msk [vmem:[#allocation8] sm:$0x1] %vm103, %v102
    $region25: #{_overall_error_jit.1} parent=1 // pred_fallthru
      _
    // Predicated region
    $region26: #{_overall_error_jit.1} parent=1 // pred_check
      _
    $region27: #{_overall_error_jit.1} parent=1 // pred_check_branch
      %106 = sbr.rel (0) target = $region29
    $region28: #{_overall_error_jit.1} parent=1 // pred_region
      %s108 = ssub.s32 16, 16
      %109 = vsyncadd [#allocation5], %s108
      %s111 = sshll.u32 [#allocation8], 4
      %s112 = int_to_ptr.vmem [resolvable:$true] %s111
      %114 = dma.vmem_to_hbm [thread:$0]  %s112, 16, %s2, [#allocation5]
    $region29: #{_overall_error_jit.1} parent=1 // pred_fallthru
      _
    // Predicated region
    $region30: #{_overall_error_jit.1} parent=1 // pred_check
      _
    $region31: #{_overall_error_jit.1} parent=1 // pred_check_branch
      %116 = sbr.rel (0) target = $region33
    $region32: #{_overall_error_jit.1} parent=1 // pred_region
      %117 = dma.done [#allocation5], 16
    $region33: #{_overall_error_jit.1} parent=1 // pred_fallthru
      _
    %118 = vsyncpa [#allocation4], 1
    %119 = vsyncpa [#allocation7], 1
    %120 = vsyncpa [#allocation5], 1

</llo_original>
